<compile_context>
chip_gen: v7x
topology: tpu7x:2x2x1
jax: 0.10.0
libtpu: 0.0.40
codegen_flags: <defaults>
</compile_context>

<pallas_src>
import functools
import math

import jax
import jax.numpy as jnp
from jax import lax
from jax.experimental import pallas as pl
from jax.experimental.pallas import tpu as pltpu


_VMEM_BUDGET = 28 * 1024 * 1024  # stay under the default 32 MiB scoped VMEM limit


def _pick_tile(n: int, cap: int, fits) -> int:
    """Largest 'nice' tile <= cap that divides n and fits VMEM (falls back to n)."""
    for t in (1024, 512, 256, 128, 64, 32, 16, 8):
        if t <= cap and t <= n and n % t == 0 and fits(t):
            return t
    return n


# ---------------------------------------------------------------------------
# Kernel 1: fused Q/K/V projection  [q|k|v] = x @ [Wq*s|Wk|Wv] + [bq*s|bk|bv]
#           (s = 1/sqrt(E) folded into the Q branch by the wrapper)
# ---------------------------------------------------------------------------
def _qkv_proj_kernel(x_ref, w_ref, b_ref, q_ref, k_ref, v_ref, *, E: int):
    x = x_ref[...]                                              # (tm, E)  bf16
    w = w_ref[...]                                              # (E, 3E)  bf16
    acc = jnp.dot(x, w, preferred_element_type=jnp.float32)    # MXU, f32 acc
    acc = acc + b_ref[...]                                      # f32 bias broadcast
    q_ref[...] = acc[:, :E].astype(q_ref.dtype)                 # bf16 stores
    k_ref[...] = acc[:, E:2 * E].astype(k_ref.dtype)
    v_ref[...] = acc[:, 2 * E:].astype(v_ref.dtype)


# ---------------------------------------------------------------------------
# Kernel 2: attention for one (batch, query-tile) grid point
# ---------------------------------------------------------------------------
def _attention_kernel(q_ref, k_ref, v_ref, attn_ref, scores_ref, *,
                      causal: bool, tq: int):
    qi = pl.program_id(1)

    q = q_ref[0]                                  # (tq, E) bf16, pre-scaled by 1/sqrt(E)
    k = k_ref[0]                                  # (S,  E) bf16
    v = v_ref[0]                                  # (S,  E) bf16

    # scores = (Q*scale) @ K^T  -- transposed contraction, no explicit k.T
    s = lax.dot_general(
        q, k, dimension_numbers=(((1,), (1,)), ((), ())),
        preferred_element_type=jnp.float32)                      # (tq, S) f32

    if causal:
        s_kv = s.shape[1]
        row = lax.broadcasted_iota(jnp.int32, (tq, s_kv), 0) + qi * tq
        col = lax.broadcasted_iota(jnp.int32, (tq, s_kv), 1)
        s = jnp.where(col > row, jnp.float32(-1e9), s)           # torch.tril mask

    # numerically-stable softmax in f32; divide on the EUP slot
    m = jnp.max(s, axis=-1, keepdims=True)
    e = jnp.exp(s - m)
    p = e * pl.reciprocal(jnp.sum(e, axis=-1, keepdims=True), approx=True)

    scores_ref[0] = p.astype(scores_ref.dtype)                   # f32 per contract
    attn = jnp.dot(p.astype(jnp.bfloat16), v,
                   preferred_element_type=jnp.float32)           # (tq, E)
    attn_ref[0] = attn.astype(attn_ref.dtype)


# ---------------------------------------------------------------------------
# Wrapper
# ---------------------------------------------------------------------------
def attention_layer(embeddings, wq, wk, wv, bq, bk, bv, mask: bool = True):
    """Pallas implementation of AttentionLayer.forward.

    embeddings: (B, S, E) float32
    wq/wk/wv  : (E, E) float32   (already transposed vs torch Linear weight)
    bq/bk/bv  : (1, E) float32
    mask      : Python bool -> causal (lower-triangular) masking like torch.tril
    Returns (attention (B, S, E) f32, attention_scores (B, S, S) f32).

    Note: matmuls run in bf16 with f32 accumulation and the softmax divide is an
    approximate EUP reciprocal, so attention_scores rows sum to 1 only within
    ~1e-2 relative error of the exact f32 PyTorch reference.
    """
    B, S, E = embeddings.shape
    M = B * S
    scale = 1.0 / math.sqrt(E)

    # Fold the 1/sqrt(E) score scale into the Q projection (mathematically
    # identical: (Q*s) @ K^T == (Q @ K^T) * s), and pre-cast weights/activations
    # to bf16 so no casts are re-executed inside the kernels.
    w3 = jnp.concatenate([wq * scale, wk, wv], axis=1).astype(jnp.bfloat16)  # (E, 3E)
    b3 = jnp.concatenate([bq * scale, bk, bv], axis=1)                       # (1, 3E) f32
    x = embeddings.reshape(M, E).astype(jnp.bfloat16)                        # (M, E)

    # --- QKV projection -----------------------------------------------------
    def qkv_fits(tm):
        blk = (tm * E * 2            # x tile      (bf16)
               + E * 3 * E * 2       # fused W     (bf16)
               + 3 * E * 4           # fused bias  (f32)
               + 3 * tm * E * 2)     # q/k/v tiles (bf16)
        return 2 * blk <= _VMEM_BUDGET     # double-buffered pipeline

    tm = _pick_tile(M, 512, qkv_fits)
    qkv_out = jax.ShapeDtypeStruct((M, E), jnp.bfloat16)
    q, k, v = pl.pallas_call(
        functools.partial(_qkv_proj_kernel, E=E),
        out_shape=(qkv_out, qkv_out, qkv_out),
        grid=(M // tm,),
        in_specs=[
            pl.BlockSpec((tm, E), lambda i: (i, 0)),        # x rows
            pl.BlockSpec((E, 3 * E), lambda i: (0, 0)),     # fused weights (resident)
            pl.BlockSpec((1, 3 * E), lambda i: (0, 0)),     # fused bias
        ],
        out_specs=(
            pl.BlockSpec((tm, E), lambda i: (i, 0)),        # Q (bf16)
            pl.BlockSpec((tm, E), lambda i: (i, 0)),        # K (bf16)
            pl.BlockSpec((tm, E), lambda i: (i, 0)),        # V (bf16)
        ),
        compiler_params=pltpu.CompilerParams(
            dimension_semantics=("parallel",)),
    )(x, w3, b3)

    # Free reshapes (row-major contiguous) -- no extra HBM round trip.
    q = q.reshape(B, S, E)
    k = k.reshape(B, S, E)
    v = v.reshape(B, S, E)

    # --- attention, tiled over (batch, query-tile) ---------------------------
    def attn_fits(tq):
        blk = (tq * E * 2            # Q tile           (bf16)
               + 2 * S * E * 2       # full-seq K and V (bf16)
               + tq * E * 4          # attention tile   (f32)
               + tq * S * 4)         # scores tile      (f32)
        return 2 * blk <= _VMEM_BUDGET

    # 256-row query tiles feed the 256-wide MXU on v6e/v7x at full height; the
    # VMEM gate drops back to smaller tiles when the (tq,S) score tile or the
    # bf16 K/V blocks would overflow the scoped limit (important on v7x).
    tq = _pick_tile(S, 256, attn_fits)
    kernel = functools.partial(_attention_kernel, causal=bool(mask), tq=tq)

    attn, scores = pl.pallas_call(
        kernel,
        out_shape=(
            jax.ShapeDtypeStruct((B, S, E), jnp.float32),
            jax.ShapeDtypeStruct((B, S, S), jnp.float32),
        ),
        grid=(B, S // tq),
        in_specs=[
            pl.BlockSpec((1, tq, E), lambda b, qi: (b, qi, 0)),  # Q tile
            pl.BlockSpec((1, S, E), lambda b, qi: (b, 0, 0)),    # K (full per batch, bf16)
            pl.BlockSpec((1, S, E), lambda b, qi: (b, 0, 0)),    # V (full per batch, bf16)
        ],
        out_specs=(
            pl.BlockSpec((1, tq, E), lambda b, qi: (b, qi, 0)),  # attention
            pl.BlockSpec((1, tq, S), lambda b, qi: (b, qi, 0)),  # attention_scores
        ),
        compiler_params=pltpu.CompilerParams(
            dimension_semantics=("parallel", "parallel")),
    )(q, k, v)

    return attn, scores


def _reference(embeddings, wq, wk, wv, bq, bk, bv, mask: bool):
    # Pure-JAX f32 reference mirroring the PyTorch module.
    q = embeddings @ wq + bq[0]
    k = embeddings @ wk + bk[0]
    v = embeddings @ wv + bv[0]
    s = jnp.einsum('bqe,bke->bqk', q, k) / math.sqrt(k.shape[-1])
    if mask:
        S = embeddings.shape[1]
        tril = jnp.tril(jnp.ones((1, S, S)))
        s = jnp.where(tril == 0, jnp.float32(-1e9), s)
    p = jax.nn.softmax(s, axis=-1)
    return p @ v, p


if __name__ == "__main__":
    B, S, E = 2, 8, 32
    key = jax.random.PRNGKey(0)
    kx, kq, kk, kv, kbq, kbk, kbv = jax.random.split(key, 7)

    # Deterministic synthetic parameters (nn.Linear(embed_size, embed_size) x3)
    bound = 1.0 / math.sqrt(E)
    embeddings = jax.random.normal(kx, (B, S, E), dtype=jnp.float32)
    wq = jax.random.uniform(kq, (E, E), jnp.float32, -bound, bound)
    wk = jax.random.uniform(kk, (E, E), jnp.float32, -bound, bound)
    wv = jax.random.uniform(kv, (E, E), jnp.float32, -bound, bound)
    bq = jax.random.uniform(kbq, (1, E), jnp.float32, -bound, bound)
    bk = jax.random.uniform(kbk, (1, E), jnp.float32, -bound, bound)
    bv = jax.random.uniform(kbv, (1, E), jnp.float32, -bound, bound)

    attn, scores = attention_layer(embeddings, wq, wk, wv, bq, bk, bv, mask=True)
    jax.block_until_ready((attn, scores))

    # Sanity check vs. pure-JAX f32 reference (bf16 matmuls -> looser tolerance)
    ref_attn, ref_scores = _reference(embeddings, wq, wk, wv, bq, bk, bv, mask=True)
    assert jnp.allclose(attn, ref_attn, atol=2e-2, rtol=2e-2)
    assert jnp.allclose(scores, ref_scores, atol=2e-2, rtol=2e-2)

    print("KERNEL_OK")
</pallas_src>

<mosaic_0001>
module attributes {stable_mosaic.version = 11 : i64} {
  func.func @_qkv_proj_kernel(%arg0: i32, %arg1: memref<16x32xbf16, #tpu.memory_space<vmem>>, %arg2: memref<32x96xbf16, #tpu.memory_space<vmem>>, %arg3: memref<1x96xf32, #tpu.memory_space<vmem>>, %arg4: memref<16x32xbf16, #tpu.memory_space<vmem>>, %arg5: memref<16x32xbf16, #tpu.memory_space<vmem>>, %arg6: memref<16x32xbf16, #tpu.memory_space<vmem>>) attributes {dimension_semantics = [#tpu.dimension_semantics<parallel>], iteration_bounds = array<i64: 1>, scalar_prefetch = 0 : i64, scratch_operands = 0 : i64, tpu.core_type = #tpu.core_type<tc>, window_params = [{transform_indices = @transform_0, window_bounds = array<i64: 16, 32>}, {pipeline_mode = #tpu.pipeline_mode<synchronous>, transform_indices = @transform_1, window_bounds = array<i64: 32, 96>}, {pipeline_mode = #tpu.pipeline_mode<synchronous>, transform_indices = @transform_2, window_bounds = array<i64: 1, 96>}, {transform_indices = @transform_3, window_bounds = array<i64: 16, 32>}, {transform_indices = @transform_4, window_bounds = array<i64: 16, 32>}, {transform_indices = @transform_5, window_bounds = array<i64: 16, 32>}]} {
    %c0 = arith.constant 0 : index
    %c0_0 = arith.constant 0 : index
    %0 = vector.load %arg1[%c0, %c0_0] : memref<16x32xbf16, #tpu.memory_space<vmem>>, vector<16x32xbf16>
    %c0_1 = arith.constant 0 : index
    %c0_2 = arith.constant 0 : index
    %1 = vector.load %arg2[%c0_1, %c0_2] : memref<32x96xbf16, #tpu.memory_space<vmem>>, vector<32x96xbf16>
    %cst = arith.constant dense<0.000000e+00> : vector<16x96xf32>
    %2 = tpu.matmul %0, %1, %cst {dimension_numbers = #tpu.dot_dimension_numbers<[1], [0], [0], [1], [0, 0, 1, 1], [], []>} : vector<16x32xbf16>, vector<32x96xbf16>, vector<16x96xf32> -> vector<16x96xf32>
    %c0_3 = arith.constant 0 : index
    %c0_4 = arith.constant 0 : index
    %3 = vector.load %arg3[%c0_3, %c0_4] : memref<1x96xf32, #tpu.memory_space<vmem>>, vector<1x96xf32>
    %4 = vector.broadcast %3 : vector<1x96xf32> to vector<16x96xf32>
    %5 = arith.addf %2, %4 : vector<16x96xf32>
    %6 = vector.extract_strided_slice %5 {offsets = [0, 0], sizes = [16, 32], strides = [1, 1]} : vector<16x96xf32> to vector<16x32xf32>
    %7 = arith.truncf %6 : vector<16x32xf32> to vector<16x32xbf16>
    %c0_5 = arith.constant 0 : index
    %c0_6 = arith.constant 0 : index
    %8 = vector.load %arg4[%c0_5, %c0_6] : memref<16x32xbf16, #tpu.memory_space<vmem>>, vector<16x32xbf16>
    tpu.vector_store %arg4[%c0_5, %c0_6], %7 {strides = array<i32>} : memref<16x32xbf16, #tpu.memory_space<vmem>>, vector<16x32xbf16>,
    %9 = vector.extract_strided_slice %5 {offsets = [0, 32], sizes = [16, 32], strides = [1, 1]} : vector<16x96xf32> to vector<16x32xf32>
    %10 = arith.truncf %9 : vector<16x32xf32> to vector<16x32xbf16>
    %c0_7 = arith.constant 0 : index
    %c0_8 = arith.constant 0 : index
    %11 = vector.load %arg5[%c0_7, %c0_8] : memref<16x32xbf16, #tpu.memory_space<vmem>>, vector<16x32xbf16>
    tpu.vector_store %arg5[%c0_7, %c0_8], %10 {strides = array<i32>} : memref<16x32xbf16, #tpu.memory_space<vmem>>, vector<16x32xbf16>,
    %12 = vector.extract_strided_slice %5 {offsets = [0, 64], sizes = [16, 32], strides = [1, 1]} : vector<16x96xf32> to vector<16x32xf32>
    %13 = arith.truncf %12 : vector<16x32xf32> to vector<16x32xbf16>
    %c0_9 = arith.constant 0 : index
    %c0_10 = arith.constant 0 : index
    %14 = vector.load %arg6[%c0_9, %c0_10] : memref<16x32xbf16, #tpu.memory_space<vmem>>, vector<16x32xbf16>
    tpu.vector_store %arg6[%c0_9, %c0_10], %13 {strides = array<i32>} : memref<16x32xbf16, #tpu.memory_space<vmem>>, vector<16x32xbf16>,
    return
  }
  func.func @transform_0(%arg0: i32) -> (i32, i32) {
    %c0_i32 = arith.constant 0 : i32
    %c0_i32_0 = arith.constant 0 : i32
    return %arg0, %c0_i32 : i32, i32
  }
  func.func @transform_1(%arg0: i32) -> (i32, i32) {
    %c0_i32 = arith.constant 0 : i32
    %c0_i32_0 = arith.constant 0 : i32
    %c0_i32_1 = arith.constant 0 : i32
    return %c0_i32, %c0_i32_0 : i32, i32
  }
  func.func @transform_2(%arg0: i32) -> (i32, i32) {
    %c0_i32 = arith.constant 0 : i32
    %c0_i32_0 = arith.constant 0 : i32
    %c0_i32_1 = arith.constant 0 : i32
    return %c0_i32, %c0_i32_0 : i32, i32
  }
  func.func @transform_3(%arg0: i32) -> (i32, i32) {
    %c0_i32 = arith.constant 0 : i32
    %c0_i32_0 = arith.constant 0 : i32
    return %arg0, %c0_i32 : i32, i32
  }
  func.func @transform_4(%arg0: i32) -> (i32, i32) {
    %c0_i32 = arith.constant 0 : i32
    %c0_i32_0 = arith.constant 0 : i32
    return %arg0, %c0_i32 : i32, i32
  }
  func.func @transform_5(%arg0: i32) -> (i32, i32) {
    %c0_i32 = arith.constant 0 : i32
    %c0_i32_0 = arith.constant 0 : i32
    return %arg0, %c0_i32 : i32, i32
  }
}

</mosaic_0001>

<llo_original>
// kernel: tpu_custom_call.1
$region0: #{tpu_custom_call.1}
  #allocation0 [shape = 'u32[]', space=smem, size = 0x4, offset = 0x4, fixed_abs, tag = 'smem constant byte address 0x4 - core index']
  #allocation1 [shape = 'u32[144,128]{1,0:T(1,128)}', space=vmem, size = 0x12000, scoped, tag = 'internal scratch']
  %s0 = inlined_call_operand.hbm [shape: bf16[16,32], index: 0, kind: input, shape index: {}]
  %s1 = inlined_call_operand.hbm [shape: bf16[32,96], index: 1, kind: input, shape index: {}]
  %s2 = inlined_call_operand.vmem [shape: f32[1,96], index: 2, kind: input, shape index: {}]
  %s3 = inlined_call_operand.hbm [shape: bf16[16,32], index: 3, kind: output, shape index: {0}]
  %s4 = inlined_call_operand.hbm [shape: bf16[16,32], index: 4, kind: output, shape index: {1}]
  %s5 = inlined_call_operand.hbm [shape: bf16[16,32], index: 5, kind: output, shape index: {2}]
  %6 = xla_tuple %s3, %s4, %s5
  %s7 = sld [smem:[#allocation0]]
  $region46: #{tpu_custom_call.1} parent=0
    _
  %s9 = ssub.s32 1, %s7
  %s10 = scalar_select 0, %s9, %s7
  $region1: #{tpu_custom_call.1} parent=0
    #allocation2 [shape = 'u8[4096]{0}', space=vmem, size = 0x1000, scoped, tag = 'input window, operand 0, single buffered']
    #allocation3 [shape = 's32[1]{0}', space=sflag, size = 0x4, scoped, tag = 'scoped memory for tpu_custom_call.1']
    #allocation4 [shape = 's32[1]{0}', space=sflag, size = 0x4, scoped, tag = 'scoped memory for tpu_custom_call.1']
    #allocation5 [shape = 'u8[8192]{0}', space=vmem, size = 0x2000, scoped, tag = 'input window, operand 1, single buffered']
    #allocation6 [shape = 's32[1]{0}', space=sflag, size = 0x4, scoped, tag = 'scoped memory for tpu_custom_call.1']
    #allocation7 [shape = 'u8[4096]{0}', space=vmem, size = 0x1000, scoped, tag = 'output window, operand 0, single buffered']
    #allocation8 [shape = 'u8[4096]{0}', space=vmem, size = 0x1000, scoped, tag = 'output window, operand 1, single buffered']
    #allocation9 [shape = 's32[1]{0}', space=sflag, size = 0x4, scoped, tag = 'scoped memory for tpu_custom_call.1']
    #allocation10 [shape = 'u8[4096]{0}', space=vmem, size = 0x1000, scoped, tag = 'output window, operand 2, single buffered']
    %11 = vsyncpa [#allocation3], 0
    %12 = vsyncpa [#allocation6], 0
    %13 = vsyncpa [#allocation4], 0
    %14 = vsyncpa [#allocation9], 0
    // Predicated region
    $region2: #{tpu_custom_call.1} parent=1 // pred_check
      _
    $region3: #{tpu_custom_call.1} parent=1 // pred_check_branch
      %16 = sbr.rel (0) target = $region5
    $region4: #{tpu_custom_call.1} parent=1 // pred_region
      %s18 = ssub.s32 128, 128
      %19 = vsyncadd [#allocation3], %s18
      %s20 = sshll.u32 [#allocation2], 4
      %s21 = int_to_ptr.vmem [resolvable:$true] %s20
      %26 = dma.hbm_to_vmem [thread:$0]  %s0, 128, %s21, [#allocation3], 64, 64, 4
    $region5: #{tpu_custom_call.1} parent=1 // pred_fallthru
      _
    // Predicated region
    $region6: #{tpu_custom_call.1} parent=1 // pred_check
      _
    $region7: #{tpu_custom_call.1} parent=1 // pred_check_branch
      %28 = sbr.rel (0) target = $region9
    $region8: #{tpu_custom_call.1} parent=1 // pred_region
      %s30 = ssub.s32 256, 256
      %31 = vsyncadd [#allocation6], %s30
      %s32 = sshll.u32 [#allocation5], 4
      %s33 = int_to_ptr.vmem [resolvable:$true] %s32
      %38 = dma.hbm_to_vmem [thread:$0]  %s1, 256, %s33, [#allocation6], 64, 64, 4
    $region9: #{tpu_custom_call.1} parent=1 // pred_fallthru
      _
    // Predicated region
    $region10: #{tpu_custom_call.1} parent=1 // pred_check
      _
    $region11: #{tpu_custom_call.1} parent=1 // pred_check_branch
      %40 = sbr.rel (0) target = $region13
    $region12: #{tpu_custom_call.1} parent=1 // pred_region
      _
    $region13: #{tpu_custom_call.1} parent=1 // pred_fallthru
      _
    // Predicated region
    $region14: #{tpu_custom_call.1} parent=1 // pred_check
      _
    $region15: #{tpu_custom_call.1} parent=1 // pred_check_branch
      %42 = sbr.rel (0) target = $region17
    $region16: #{tpu_custom_call.1} parent=1 // pred_region
      %43 = dma.done [#allocation3], 128
    $region17: #{tpu_custom_call.1} parent=1 // pred_fallthru
      _
    // Predicated region
    $region18: #{tpu_custom_call.1} parent=1 // pred_check
      _
    $region19: #{tpu_custom_call.1} parent=1 // pred_check_branch
      %45 = sbr.rel (0) target = $region21
    $region20: #{tpu_custom_call.1} parent=1 // pred_region
      %46 = dma.done [#allocation6], 256
    $region21: #{tpu_custom_call.1} parent=1 // pred_fallthru
      _
    %v48 = vld [vmem:[#allocation2] sm:$0xf]
    %v49 = vld [vmem:[#allocation2 + $0x4] sm:$0xf]
    %v50 = vld [vmem:[#allocation5] sm:$0xf]
    %v51 = vld [vmem:[#allocation5 + $0x4] sm:$0xf]
    %v52 = vld [vmem:[#allocation5 + $0x8] sm:$0xf]
    %v53 = vld [vmem:[#allocation5 + $0xc] sm:$0xf]
    %v54 = vld [vmem:[%s2] sm:$0x1]
    %v56 = vlaneseq
    %v57 = vshrl.u32 %v56, 7
    %v58 = vsub.s32 0, %v57
    %v59 = vrot.slane %v54, %v58
    %v63 = vunpack.c.l.b16 %v48
    %v64 = vunpack.c.l.b16 %v49
    %v65 = vpack.c.b16 %v64, %v63
    %v70 = vunpack.c.l.b16 %v50
    %v71 = vunpack.c.l.b16 %v51
    %v72 = vunpack.c.l.b16 %v52
    %v73 = vunpack.c.l.b16 %v53
    %v74 = vpack.c.b16 %v71, %v70
    %v75 = vpack.c.b16 %v73, %v72
    %vm78 = vcmask 261120
    %v80 = vsel %vm78, %v65, 0
    %82 = vmatprep.subr.bf16.mxu0 0
    %83 = vmatpush1.bf16.msra.mxu0 %v74
    %84 = vmatprep.subr.bf16.mxu0 0
    %85 = vmatpush1.bf16.msra.mxu0 %v75
    %86 = vmatprep.subr.bf16.mxu0 0
    %87 = vmatpush1.bf16.msra.mxu0 0
    %88 = vmatprep.subr.bf16.mxu0 0
    %89 = vmatpush1.bf16.msra.mxu0 0
    %90 = vmatprep.subr.bf16.mxu0 0
    %91 = vmatpush1.bf16.msra.mxu0 0
    %92 = vmatprep.subr.bf16.mxu0 0
    %93 = vmatpush1.bf16.msra.mxu0 0
    %94 = vmatprep.subr.bf16.mxu0 0
    %95 = vmatpush1.bf16.msra.mxu0 0
    %96 = vmatprep.subr.bf16.mxu0 0
    %97 = vmatpush1.bf16.msra.mxu0 0
    %98 = vmatprep.subr.bf16.mxu0 0
    %99 = vmatpush1.bf16.msra.mxu0 0
    %100 = vmatprep.subr.bf16.mxu0 0
    %101 = vmatpush1.bf16.msra.mxu0 0
    %102 = vmatprep.subr.bf16.mxu0 0
    %103 = vmatpush1.bf16.msra.mxu0 0
    %104 = vmatprep.subr.bf16.mxu0 0
    %105 = vmatpush1.bf16.msra.mxu0 0
    %106 = vmatprep.subr.bf16.mxu0 0
    %107 = vmatpush1.bf16.msra.mxu0 0
    %108 = vmatprep.subr.bf16.mxu0 0
    %109 = vmatpush1.bf16.msra.mxu0 0
    %110 = vmatprep.subr.bf16.mxu0 0
    %111 = vmatpush1.bf16.msra.mxu0 0
    %112 = vmatprep.subr.bf16.mxu0 0
    %113 = vmatpush1.bf16.msra.mxu0 0
    %114 = vmatprep.mubr.bf16.mxu0 0
    %115 = vmatmul.mubr.bf16.gmra.mrb[0].mxu0 %v80
    %v116 = vpop.f32.mrb[0].mxu0
    %v117 = vadd.f32 %v59, %v116
    %v118 = vpop.f32.mrb[0].mxu0
    %v119 = vpop.f32.mrb[0].mxu0
    %v120 = vadd.f32 %v59, %v119
    %v121 = vpop.f32.mrb[0].mxu0
    %122 = vdwg.mxu0
    %v123 = vpack.c.bf16 %v120, %v117
    %v125 = vunpack.c.l.b16 %v123
    %v126 = vunpack.c.h.b16 %v123
    %v127 = vpack.c.b16 %v125, %v125
    %v128 = vpack.c.b16 %v126, %v126
    %vm131 = vcmask 257024
    %132 = vst.msk [vmem:[#allocation7] sm:$0xf] %vm131, %v127
    %133 = vst.msk [vmem:[#allocation7 + $0x4] sm:$0xf] %vm131, %v128
    %134 = vrot.lane.b32.xlu0 %v127, 96
    %v135 = vpop.permute.xlu0 %134
    %136 = vrot.lane.b32.xlu0 %v128, 96
    %v137 = vpop.permute.xlu0 %136
    %140 = vst.msk [vmem:[#allocation8] sm:$0xf] %vm131, %v135
    %141 = vst.msk [vmem:[#allocation8 + $0x4] sm:$0xf] %vm131, %v137
    %142 = vrot.lane.b32.xlu0 %v127, 64
    %v143 = vpop.permute.xlu0 %142
    %144 = vrot.lane.b32.xlu0 %v128, 64
    %v145 = vpop.permute.xlu0 %144
    %148 = vst.msk [vmem:[#allocation10] sm:$0xf] %vm131, %v143
    %149 = vst.msk [vmem:[#allocation10 + $0x4] sm:$0xf] %vm131, %v145
    // Predicated region
    $region22: #{tpu_custom_call.1} parent=1 // pred_check
      _
    $region23: #{tpu_custom_call.1} parent=1 // pred_check_branch
      %151 = sbr.rel (0) target = $region25
    $region24: #{tpu_custom_call.1} parent=1 // pred_region
      %s153 = ssub.s32 128, 128
      %154 = vsyncadd [#allocation4], %s153
      %s155 = sshll.u32 [#allocation7], 4
      %s156 = int_to_ptr.vmem [resolvable:$true] %s155
      %161 = dma.vmem_to_hbm [thread:$0]  %s156, 128, %s3, [#allocation4], 64, 64, 4
    $region25: #{tpu_custom_call.1} parent=1 // pred_fallthru
      _
    // Predicated region
    $region26: #{tpu_custom_call.1} parent=1 // pred_check
      _
    $region27: #{tpu_custom_call.1} parent=1 // pred_check_branch
      %163 = sbr.rel (0) target = $region29
    $region28: #{tpu_custom_call.1} parent=1 // pred_region
      %s165 = ssub.s32 128, 128
      %166 = vsyncadd [#allocation9], %s165
      %s167 = sshll.u32 [#allocation8], 4
      %s168 = int_to_ptr.vmem [resolvable:$true] %s167
      %173 = dma.vmem_to_hbm [thread:$0]  %s168, 128, %s4, [#allocation9], 64, 64, 4
    $region29: #{tpu_custom_call.1} parent=1 // pred_fallthru
      _
    // Predicated region
    $region30: #{tpu_custom_call.1} parent=1 // pred_check
      _
    $region31: #{tpu_custom_call.1} parent=1 // pred_check_branch
      %175 = sbr.rel (0) target = $region33
    $region32: #{tpu_custom_call.1} parent=1 // pred_region
      %s177 = ssub.s32 128, 128
      %178 = vsyncadd [#allocation9], %s177
      %s179 = sshll.u32 [#allocation10], 4
      %s180 = int_to_ptr.vmem [resolvable:$true] %s179
      %185 = dma.vmem_to_hbm [thread:$0]  %s180, 128, %s5, [#allocation9], 64, 64, 4
    $region33: #{tpu_custom_call.1} parent=1 // pred_fallthru
      _
    // Predicated region
    $region34: #{tpu_custom_call.1} parent=1 // pred_check
      _
    $region35: #{tpu_custom_call.1} parent=1 // pred_check_branch
      %187 = sbr.rel (0) target = $region37
    $region36: #{tpu_custom_call.1} parent=1 // pred_region
      %188 = dma.done [#allocation4], 128
    $region37: #{tpu_custom_call.1} parent=1 // pred_fallthru
      _
    // Predicated region
    $region38: #{tpu_custom_call.1} parent=1 // pred_check
      _
    $region39: #{tpu_custom_call.1} parent=1 // pred_check_branch
      %190 = sbr.rel (0) target = $region41
    $region40: #{tpu_custom_call.1} parent=1 // pred_region
      %191 = dma.done [#allocation9], 128
    $region41: #{tpu_custom_call.1} parent=1 // pred_fallthru
      _
    // Predicated region
    $region42: #{tpu_custom_call.1} parent=1 // pred_check
      _
    $region43: #{tpu_custom_call.1} parent=1 // pred_check_branch
      %193 = sbr.rel (0) target = $region45
    $region44: #{tpu_custom_call.1} parent=1 // pred_region
      %194 = dma.done [#allocation9], 128
    $region45: #{tpu_custom_call.1} parent=1 // pred_fallthru
      _
    %195 = vsyncpa [#allocation3], 1
    %196 = vsyncpa [#allocation6], 1
    %197 = vsyncpa [#allocation4], 1
    %198 = vsyncpa [#allocation9], 1

</llo_original>
